<compile_context>
chip_gen: v7x
topology: tpu7x:2x2x1
jax: 0.10.0
libtpu: 0.0.40
codegen_flags: <defaults>
</compile_context>

<pallas_src>
import functools

import jax
import jax.numpy as jnp
from jax.experimental import pallas as pl
from jax.experimental.pallas import tpu as pltpu


# ----------------------------------------------------------------------------
# helpers
# ----------------------------------------------------------------------------
def _round_up(x, m):
    return (x + m - 1) // m * m


def _pad_to(arr, shape):
    pads = [(0, t - s) for s, t in zip(arr.shape, shape)]
    if all(p == (0, 0) for p in pads):
        return arr
    return jnp.pad(arr, pads)


def _tile_config():
    """Per-generation tile / VMEM-limit choices (perf-review targets)."""
    try:
        kind = jax.devices()[0].device_kind.lower()
    except Exception:
        kind = ""
    if "v5 lite" in kind or "v5e" in kind or "v5lite" in kind:
        # v5e ridge ~240 flop/B: 512x512 output tiles cross to MXU-bound.
        return dict(tm=512, tn=512, tk=1024, vmem_limit=64 << 20)
    if "v6" in kind:
        # v6e ridge ~680 flop/B: needs ~1024-class output tiles; raise scoped VMEM.
        return dict(tm=1024, tn=1024, tk=512, vmem_limit=64 << 20)
    if "7x" in kind or "v7" in kind:
        # v7x: lower ridge (~310 flop/B) but only 64 MiB physical VMEM.
        return dict(tm=1024, tn=1024, tk=512, vmem_limit=48 << 20)
    # Unknown chip: conservative tiles, keep default scoped-VMEM limit.
    return dict(tm=512, tn=512, tk=512, vmem_limit=None)


# ----------------------------------------------------------------------------
# Pallas kernels
# ----------------------------------------------------------------------------
def _lora_down_kernel(x_ref, bt_ref, o_ref, acc_ref):
    """xb = x @ B^T  — tiny (lane width r_pad=128) down-projection kernel."""
    k = pl.program_id(1)

    @pl.when(k == 0)
    def _init():
        acc_ref[...] = jnp.zeros_like(acc_ref)

    acc_ref[...] += jnp.dot(x_ref[...], bt_ref[...],
                            preferred_element_type=jnp.float32)

    @pl.when(k == pl.num_programs(1) - 1)
    def _store():
        o_ref[...] = acc_ref[...].astype(o_ref.dtype)


def _relora_linear_kernel(x_ref, wt_ref, bias_ref, xb_ref, at_ref, o_ref,
                          acc_ref, *, apply_gelu):
    """out = gelu?( x@W^T + bias + xb@(-scale*A^T) ) on one (tm, tn) tile."""
    k = pl.program_id(2)

    @pl.when(k == 0)
    def _init():
        # Bias folded into the accumulator init (no epilogue add).
        acc_ref[...] = jnp.broadcast_to(bias_ref[...], acc_ref.shape)

    acc_ref[...] += jnp.dot(x_ref[...], wt_ref[...],
                            preferred_element_type=jnp.float32)

    @pl.when(k == pl.num_programs(2) - 1)
    def _epilogue():
        out = acc_ref[...] + jnp.dot(xb_ref[...], at_ref[...],
                                     preferred_element_type=jnp.float32)
        if apply_gelu:
            # NOTE: jax.nn.gelu default is the tanh approximation (PyTorch
            # nn.GELU defaults to exact erf). The GELUs belong to the synthetic
            # wrapped model, not to ReLoRaLinear; the reference matches this.
            out = jax.nn.gelu(out)
        o_ref[...] = out.astype(o_ref.dtype)


# ----------------------------------------------------------------------------
# One-time parameter preparation (hoisted out of the per-forward path)
# ----------------------------------------------------------------------------
def prepare_layer(weight, bias, lora_B_w, lora_A_w, *, scale, compute_dtype,
                  tn, tk):
    """Pre-transpose / pad / fold -scale / cast the frozen weights once.

    weight:   [N, K]   frozen base weight (PyTorch layout)
    bias:     [N] or None
    lora_B_w: [r, K]   (nn.Linear(in_features, r).weight)
    lora_A_w: [N, r]   (nn.Linear(r, out_features).weight)
    """
    N, K = weight.shape
    r = lora_B_w.shape[0]
    assert lora_A_w.shape == (N, r)
    cd = jnp.dtype(compute_dtype)

    Kp = _round_up(K, 128)
    Np = _round_up(N, 128)
    r_pad = _round_up(r, 128)                  # lane-dense LoRA rank
    tk_e = min(tk, Kp)
    tn_e = min(tn, Np)
    Kp = _round_up(Kp, tk_e)
    Np = _round_up(Np, tn_e)

    wt = _pad_to(weight.T, (Kp, Np)).astype(cd)                       # (Kp, Np)
    bt = _pad_to(lora_B_w.T, (Kp, r_pad)).astype(cd)                  # (Kp, r_pad)
    at = _pad_to((-float(scale)) * lora_A_w.T, (r_pad, Np)).astype(cd)  # (r_pad, Np)
    if bias is None:
        b2 = jnp.zeros((1, Np), jnp.float32)
    else:
        b2 = _pad_to(bias.reshape(1, N).astype(jnp.float32), (1, Np))

    return dict(wt=wt, bt=bt, at=at, b2=b2, N=N, K=K, Kp=Kp, Np=Np,
                r_pad=r_pad, tk_e=tk_e, tn_e=tn_e)


def prepare_relora_params(params, *, scale, compute_dtype, tn, tk):
    return {name: prepare_layer(p["weight"], p["bias"], p["lora_B"], p["lora_A"],
                                scale=scale, compute_dtype=compute_dtype,
                                tn=tn, tk=tk)
            for name, p in params.items()}


# ----------------------------------------------------------------------------
# ReLoRaLinear forward on prepared params; returns the PADDED (Mp, Np) output
# so consecutive layers can be chained without slice/pad round-trips.
# ----------------------------------------------------------------------------
def relora_linear_prepared(x2d, prep, *, apply_gelu, out_dtype, tm,
                           compute_dtype, vmem_limit=None):
    cd = jnp.dtype(compute_dtype)
    Kp, Np, r_pad = prep["Kp"], prep["Np"], prep["r_pad"]
    tk_e, tn_e = prep["tk_e"], prep["tn_e"]

    M = x2d.shape[0]
    tm_e = min(tm, _round_up(M, 8))
    Mp = _round_up(M, tm_e)

    xp = x2d
    if xp.shape[1] > Kp:          # previous layer's zero padding wider than Kp
        xp = xp[:, :Kp]
    xp = _pad_to(xp, (Mp, Kp)).astype(cd)

    # --- LoRA down-projection xb = x @ B^T, hoisted out of the main kernel.
    xb = pl.pallas_call(
        _lora_down_kernel,
        out_shape=jax.ShapeDtypeStruct((Mp, r_pad), cd),
        grid_spec=pltpu.PrefetchScalarGridSpec(
            num_scalar_prefetch=0,
            grid=(Mp // tm_e, Kp // tk_e),
            in_specs=[
                pl.BlockSpec((tm_e, tk_e), lambda i, k: (i, k)),
                pl.BlockSpec((tk_e, r_pad), lambda i, k: (k, 0)),
            ],
            out_specs=pl.BlockSpec((tm_e, r_pad), lambda i, k: (i, 0)),
            scratch_shapes=[pltpu.VMEM((tm_e, r_pad), jnp.float32)],
        ),
        compiler_params=pltpu.CompilerParams(
            dimension_semantics=("parallel", "arbitrary")),
    )(xp, prep["bt"])

    # --- Fused base matmul + bias + LoRA correction (+ optional GELU).
    grid = (Mp // tm_e, Np // tn_e, Kp // tk_e)
    kernel = functools.partial(_relora_linear_kernel, apply_gelu=apply_gelu)

    flops = 2 * Mp * Np * Kp + 2 * Mp * r_pad * Np
    bytes_accessed = int(
        (xp.size + prep["wt"].size + xb.size + prep["at"].size) * cd.itemsize
        + prep["b2"].size * 4 + Mp * Np * jnp.dtype(out_dtype).itemsize)

    cp_kwargs = dict(dimension_semantics=("parallel", "parallel", "arbitrary"))
    if vmem_limit is not None:
        cp_kwargs["vmem_limit_bytes"] = int(vmem_limit)

    out = pl.pallas_call(
        kernel,
        out_shape=jax.ShapeDtypeStruct((Mp, Np), out_dtype),
        grid_spec=pltpu.PrefetchScalarGridSpec(
            num_scalar_prefetch=0,
            grid=grid,
            in_specs=[
                pl.BlockSpec((tm_e, tk_e), lambda i, j, k: (i, k)),    # x tile
                pl.BlockSpec((tk_e, tn_e), lambda i, j, k: (k, j)),    # W^T tile
                pl.BlockSpec((1, tn_e), lambda i, j, k: (0, j)),       # bias
                pl.BlockSpec((tm_e, r_pad), lambda i, j, k: (i, 0)),   # xb (precomputed)
                pl.BlockSpec((r_pad, tn_e), lambda i, j, k: (0, j)),   # -scale*A^T
            ],
            out_specs=pl.BlockSpec((tm_e, tn_e), lambda i, j, k: (i, j)),
            scratch_shapes=[pltpu.VMEM((tm_e, tn_e), jnp.float32)],
        ),
        compiler_params=pltpu.CompilerParams(**cp_kwargs),
        cost_estimate=pl.CostEstimate(
            flops=flops,
            transcendentals=(Mp * Np) if apply_gelu else 0,
            bytes_accessed=bytes_accessed),
    )(xp, prep["wt"], prep["b2"], xb, prep["at"])

    return out  # padded (Mp, Np); the model forward slices once at the end


# ----------------------------------------------------------------------------
# Synthetic "wrapped model": attention.dense -> GELU -> mlp.fc -> GELU -> mlp.out
# All three linears match target_modules=['attn','attention','mlp'] and are
# therefore ReLoRaLinear layers.  GELUs are fused into the producing kernel.
# ----------------------------------------------------------------------------
_LAYERS = (("attention.dense", True), ("mlp.fc", True), ("mlp.out", False))


def relora_model_forward(prep_params, x, *, tm, compute_dtype, vmem_limit=None):
    # ReLoRaModel.forward == wrapped_model.forward with ReLoRaLinear layers.
    B, S, H = x.shape
    M = B * S
    h = x.reshape(M, H)
    final_dtype = x.dtype
    for idx, (name, gelu) in enumerate(_LAYERS):
        last = idx == len(_LAYERS) - 1
        # Low-precision (compute_dtype) activations chained between layers;
        # only the final layer emits the caller-visible dtype.
        out_dtype = final_dtype if last else jnp.dtype(compute_dtype)
        h = relora_linear_prepared(h, prep_params[name], apply_gelu=gelu,
                                   out_dtype=out_dtype, tm=tm,
                                   compute_dtype=compute_dtype,
                                   vmem_limit=vmem_limit)
    n_final = prep_params[_LAYERS[-1][0]]["N"]
    return h[:M, :n_final].reshape(B, S, n_final)


# ----------------------------------------------------------------------------
# Pure-JAX reference (same compute-dtype casting as the kernel path).
# ----------------------------------------------------------------------------
def relora_linear_ref(x2d, weight, bias, lora_B_w, lora_A_w, *, scale=1.0,
                      apply_gelu=False, compute_dtype=jnp.float32):
    cd = compute_dtype
    x = x2d.astype(cd)
    out = jnp.dot(x, weight.T.astype(cd), preferred_element_type=jnp.float32)
    if bias is not None:
        out = out + bias.astype(jnp.float32)
    xb = jnp.dot(x, lora_B_w.T.astype(cd), preferred_element_type=jnp.float32)
    lora = jnp.dot(xb.astype(cd), lora_A_w.T.astype(cd),
                   preferred_element_type=jnp.float32)
    out = out - float(scale) * lora
    if apply_gelu:
        out = jax.nn.gelu(out)
    return out.astype(x2d.dtype)


def relora_model_forward_ref(params, x, *, scale=1.0, compute_dtype=jnp.float32):
    B, S, H = x.shape
    h = x.reshape(B * S, H)
    for name, gelu in _LAYERS:
        p = params[name]
        h = relora_linear_ref(h, p["weight"], p["bias"], p["lora_B"], p["lora_A"],
                              scale=scale, apply_gelu=gelu,
                              compute_dtype=compute_dtype)
    return h.reshape(B, S, -1)


# ----------------------------------------------------------------------------
# Parameter construction (mirrors ReLoRaLinear.__init__ zero-init of lora_A/B)
# ----------------------------------------------------------------------------
def make_params(key, hidden, ffn, r, dtype=jnp.float32):
    ks = jax.random.split(key, 6)

    def linear_params(kw, kb, n_out, n_in):
        w = jax.random.normal(kw, (n_out, n_in), dtype) * (1.0 / jnp.sqrt(n_in))
        b = jax.random.normal(kb, (n_out,), dtype) * 0.01
        la = jnp.zeros((n_out, r), dtype)   # lora_A.weight (zero init)
        lb = jnp.zeros((r, n_in), dtype)    # lora_B.weight (zero init)
        return dict(weight=w, bias=b, lora_A=la, lora_B=lb)

    return {
        "attention.dense": linear_params(ks[0], ks[1], hidden, hidden),
        "mlp.fc":          linear_params(ks[2], ks[3], ffn, hidden),
        "mlp.out":         linear_params(ks[4], ks[5], hidden, ffn),
    }


if __name__ == "__main__":
    key = jax.random.PRNGKey(0)
    batch, seq, hidden, ffn, r = 2, 8, 32, 64, 8
    scale = 1.0

    kx, kp, kl = jax.random.split(key, 3)
    x = jax.random.normal(kx, (batch, seq, hidden), jnp.float32)
    params = make_params(kp, hidden, ffn, r)

    # Nonzero LoRA weights so the LoRA path is actually exercised (in PyTorch
    # these become nonzero after merge_and_reinit; zero-init is a subset).
    kl1, kl2 = jax.random.split(kl)
    for i, name in enumerate(params):
        p = params[name]
        n_out, n_in = p["weight"].shape
        p["lora_A"] = jax.random.normal(jax.random.fold_in(kl1, i),
                                        (n_out, r), jnp.float32) * 0.1
        p["lora_B"] = jax.random.normal(jax.random.fold_in(kl2, i),
                                        (r, n_in), jnp.float32) * 0.1

    cfg = _tile_config()

    # 1) f32 compute path — tight check against the pure-JAX reference.
    prep_f32 = prepare_relora_params(params, scale=scale,
                                     compute_dtype=jnp.float32,
                                     tn=cfg["tn"], tk=cfg["tk"])
    jax.block_until_ready(prep_f32)
    out_f32 = relora_model_forward(prep_f32, x, tm=cfg["tm"],
                                   compute_dtype=jnp.float32,
                                   vmem_limit=cfg["vmem_limit"])
    jax.block_until_ready(out_f32)
    ref_f32 = relora_model_forward_ref(params, x, scale=scale,
                                       compute_dtype=jnp.float32)
    assert jnp.allclose(out_f32, ref_f32, atol=1e-4, rtol=1e-4), \
        float(jnp.max(jnp.abs(out_f32 - ref_f32)))

    # 2) default bf16-MXU path — looser tolerance vs bf16-emulating reference.
    prep_bf16 = prepare_relora_params(params, scale=scale,
                                      compute_dtype=jnp.bfloat16,
                                      tn=cfg["tn"], tk=cfg["tk"])
    jax.block_until_ready(prep_bf16)
    out_bf16 = relora_model_forward(prep_bf16, x, tm=cfg["tm"],
                                    compute_dtype=jnp.bfloat16,
                                    vmem_limit=cfg["vmem_limit"])
    jax.block_until_ready(out_bf16)
    ref_bf16 = relora_model_forward_ref(params, x, scale=scale,
                                        compute_dtype=jnp.bfloat16)
    assert jnp.allclose(out_bf16, ref_bf16, atol=2e-2, rtol=2e-2), \
        float(jnp.max(jnp.abs(out_bf16 - ref_bf16)))

    # TODO(synk): lora_dropout > 0 (training-mode dropout) not implemented; the
    # ReLoRaModel default here is p=0.0 (identity). quantize / 4-bit paths and
    # merge_and_reinit (optimizer-side) are outside the forward hot path.
    print("KERNEL_OK")
</pallas_src>

<mosaic_0001>
module attributes {stable_mosaic.version = 11 : i64} {
  func.func @_lora_down_kernel(%arg0: i32, %arg1: i32, %arg2: memref<16x128xf32, #tpu.memory_space<vmem>>, %arg3: memref<128x128xf32, #tpu.memory_space<vmem>>, %arg4: memref<16x128xf32, #tpu.memory_space<vmem>>, %arg5: memref<16x128xf32, #tpu.memory_space<vmem>>) attributes {dimension_semantics = [#tpu.dimension_semantics<parallel>, #tpu.dimension_semantics<arbitrary>], iteration_bounds = array<i64: 1, 1>, scalar_prefetch = 0 : i64, scratch_operands = 1 : i64, tpu.core_type = #tpu.core_type<tc>, window_params = [{transform_indices = @transform_0, window_bounds = array<i64: 16, 128>}, {transform_indices = @transform_1, window_bounds = array<i64: 128, 128>}, {transform_indices = @transform_2, window_bounds = array<i64: 16, 128>}]} {
    %c0_i32 = arith.constant 0 : i32
    %0 = arith.cmpi eq, %arg1, %c0_i32 : i32
    %1 = arith.extui %0 : i1 to i32
    %c0_i32_0 = arith.constant 0 : i32
    %2 = arith.cmpi ne, %1, %c0_i32_0 : i32
    scf.if %2 {
      %cst_10 = arith.constant 0.000000e+00 : f32
      %12 = vector.broadcast %cst_10 : f32 to vector<16x128xf32>
      %c0_11 = arith.constant 0 : index
      %c0_12 = arith.constant 0 : index
      %13 = vector.load %arg5[%c0_11, %c0_12] : memref<16x128xf32, #tpu.memory_space<vmem>>, vector<16x128xf32>
      tpu.vector_store %arg5[%c0_11, %c0_12], %12 {strides = array<i32>} : memref<16x128xf32, #tpu.memory_space<vmem>>, vector<16x128xf32>,
    } else {
    }
    %c0 = arith.constant 0 : index
    %c0_1 = arith.constant 0 : index
    %3 = vector.load %arg5[%c0, %c0_1] : memref<16x128xf32, #tpu.memory_space<vmem>>, vector<16x128xf32>
    %c0_2 = arith.constant 0 : index
    %c0_3 = arith.constant 0 : index
    %4 = vector.load %arg2[%c0_2, %c0_3] : memref<16x128xf32, #tpu.memory_space<vmem>>, vector<16x128xf32>
    %c0_4 = arith.constant 0 : index
    %c0_5 = arith.constant 0 : index
    %5 = vector.load %arg3[%c0_4, %c0_5] : memref<128x128xf32, #tpu.memory_space<vmem>>, vector<128x128xf32>
    %cst = arith.constant dense<0.000000e+00> : vector<16x128xf32>
    %6 = tpu.matmul %4, %5, %cst {dimension_numbers = #tpu.dot_dimension_numbers<[1], [0], [0], [1], [0, 0, 1, 1], [], []>} : vector<16x128xf32>, vector<128x128xf32>, vector<16x128xf32> -> vector<16x128xf32>
    %7 = arith.addf %3, %6 : vector<16x128xf32>
    %c0_6 = arith.constant 0 : index
    %c0_7 = arith.constant 0 : index
    %8 = vector.load %arg5[%c0_6, %c0_7] : memref<16x128xf32, #tpu.memory_space<vmem>>, vector<16x128xf32>
    tpu.vector_store %arg5[%c0_6, %c0_7], %7 {strides = array<i32>} : memref<16x128xf32, #tpu.memory_space<vmem>>, vector<16x128xf32>,
    %c0_i32_8 = arith.constant 0 : i32
    %9 = arith.cmpi eq, %arg1, %c0_i32_8 : i32
    %10 = arith.extui %9 : i1 to i32
    %c0_i32_9 = arith.constant 0 : i32
    %11 = arith.cmpi ne, %10, %c0_i32_9 : i32
    scf.if %11 {
      %c0_10 = arith.constant 0 : index
      %c0_11 = arith.constant 0 : index
      %12 = vector.load %arg5[%c0_10, %c0_11] : memref<16x128xf32, #tpu.memory_space<vmem>>, vector<16x128xf32>
      %c0_12 = arith.constant 0 : index
      %c0_13 = arith.constant 0 : index
      %13 = vector.load %arg4[%c0_12, %c0_13] : memref<16x128xf32, #tpu.memory_space<vmem>>, vector<16x128xf32>
      tpu.vector_store %arg4[%c0_12, %c0_13], %12 {strides = array<i32>} : memref<16x128xf32, #tpu.memory_space<vmem>>, vector<16x128xf32>,
    } else {
    }
    return
  }
  func.func @transform_0(%arg0: i32, %arg1: i32) -> (i32, i32) {
    %c0_i32 = arith.constant 0 : i32
    return %arg0, %arg1 : i32, i32
  }
  func.func @transform_1(%arg0: i32, %arg1: i32) -> (i32, i32) {
    %c0_i32 = arith.constant 0 : i32
    %c0_i32_0 = arith.constant 0 : i32
    return %arg1, %c0_i32 : i32, i32
  }
  func.func @transform_2(%arg0: i32, %arg1: i32) -> (i32, i32) {
    %c0_i32 = arith.constant 0 : i32
    %c0_i32_0 = arith.constant 0 : i32
    return %arg0, %c0_i32 : i32, i32
  }
}

</mosaic_0001>

<llo_original>
// kernel: tpu_custom_call.1
$region0: #{tpu_custom_call.1}
  #allocation0 [shape = 'u32[]', space=smem, size = 0x4, offset = 0x4, fixed_abs, tag = 'smem constant byte address 0x4 - core index']
  #allocation1 [shape = 'u32[144,128]{1,0:T(1,128)}', space=vmem, size = 0x12000, scoped, tag = 'internal scratch']
  #allocation2 [shape = 'f32[16,128]{1,0:T(8,128)}', space=vmem, size = 0x2000, scoped, tag = 'scratch operand']
  %s0 = inlined_call_operand.hbm [shape: f32[16,128], index: 0, kind: input, shape index: {}]
  %s1 = inlined_call_operand.hbm [shape: f32[128,128], index: 1, kind: input, shape index: {}]
  %s2 = inlined_call_operand.hbm [shape: f32[16,128], index: 2, kind: output, shape index: {}]
  %s3 = sld [smem:[#allocation0]]
  $region34: #{tpu_custom_call.1} parent=0
    _
  %s5 = ssub.s32 1, %s3
  %s6 = scalar_select 0, %s5, %s3
  $region1: #{tpu_custom_call.1} parent=0
    #allocation3 [shape = 'u8[8192]{0}', space=vmem, size = 0x2000, scoped, tag = 'input window, operand 0, single buffered']
    #allocation4 [shape = 's32[1]{0}', space=sflag, size = 0x4, scoped, tag = 'scoped memory for tpu_custom_call.1']
    #allocation5 [shape = 's32[1]{0}', space=sflag, size = 0x4, scoped, tag = 'scoped memory for tpu_custom_call.1']
    #allocation6 [shape = 'u8[65536]{0}', space=vmem, size = 0x10000, scoped, tag = 'input window, operand 1, single buffered']
    #allocation7 [shape = 's32[1]{0}', space=sflag, size = 0x4, scoped, tag = 'scoped memory for tpu_custom_call.1']
    #allocation8 [shape = 'u8[8192]{0}', space=vmem, size = 0x2000, scoped, tag = 'output window, operand 0, single buffered']
    %7 = vsyncpa [#allocation4], 0
    %8 = vsyncpa [#allocation7], 0
    %9 = vsyncpa [#allocation5], 0
    // Predicated region
    $region2: #{tpu_custom_call.1} parent=1 // pred_check
      _
    $region3: #{tpu_custom_call.1} parent=1 // pred_check_branch
      %11 = sbr.rel (0) target = $region5
    $region4: #{tpu_custom_call.1} parent=1 // pred_region
      %s13 = ssub.s32 256, 256
      %14 = vsyncadd [#allocation4], %s13
      %s15 = sshll.u32 [#allocation3], 4
      %s16 = int_to_ptr.vmem [resolvable:$true] %s15
      %21 = dma.hbm_to_vmem [thread:$0]  %s0, 256, %s16, [#allocation4], 128, 128, 8
    $region5: #{tpu_custom_call.1} parent=1 // pred_fallthru
      _
    // Predicated region
    $region6: #{tpu_custom_call.1} parent=1 // pred_check
      _
    $region7: #{tpu_custom_call.1} parent=1 // pred_check_branch
      %23 = sbr.rel (0) target = $region9
    $region8: #{tpu_custom_call.1} parent=1 // pred_region
      %s25 = ssub.s32 2048, 2048
      %26 = vsyncadd [#allocation7], %s25
      %s27 = sshll.u32 [#allocation6], 4
      %s28 = int_to_ptr.vmem [resolvable:$true] %s27
      %33 = dma.hbm_to_vmem [thread:$0]  %s1, 2048, %s28, [#allocation7], 128, 128, 8
    $region9: #{tpu_custom_call.1} parent=1 // pred_fallthru
      _
    // Predicated region
    $region10: #{tpu_custom_call.1} parent=1 // pred_check
      _
    $region11: #{tpu_custom_call.1} parent=1 // pred_check_branch
      %35 = sbr.rel (0) target = $region13
    $region12: #{tpu_custom_call.1} parent=1 // pred_region
      %36 = dma.done [#allocation4], 256
    $region13: #{tpu_custom_call.1} parent=1 // pred_fallthru
      _
    // Predicated region
    $region14: #{tpu_custom_call.1} parent=1 // pred_check
      _
    $region15: #{tpu_custom_call.1} parent=1 // pred_check_branch
      %38 = sbr.rel (0) target = $region17
    $region16: #{tpu_custom_call.1} parent=1 // pred_region
      %39 = dma.done [#allocation7], 2048
    $region17: #{tpu_custom_call.1} parent=1 // pred_fallthru
      _
    %p40 = scmp.eq.s32.totalorder 0, 0
    // Predicated region
    $region18: #{tpu_custom_call.1} parent=1 // pred_check
      %p41 = pneg %p40
    $region19: #{tpu_custom_call.1} parent=1 // pred_check_branch
      %43 = sbr.rel (%p41) target = $region21
    $region20: #{tpu_custom_call.1} parent=1 // pred_region
      %44 = vst [vmem:[#allocation2] sm:$0xff] 0.0
      %45 = vst [vmem:[#allocation2 + $0x8] sm:$0xff] 0.0
    $region21: #{tpu_custom_call.1} parent=1 // pred_fallthru
      _
    %v46 = vld [vmem:[#allocation2] sm:$0xff]
    %v47 = vld [vmem:[#allocation2 + $0x8] sm:$0xff]
    %v48 = vld [vmem:[#allocation3] sm:$0xff]
    %v49 = vld [vmem:[#allocation3 + $0x8] sm:$0xff]
    %v50 = vld [vmem:[#allocation6] sm:$0xff]
    %v51 = vld [vmem:[#allocation6 + $0x8] sm:$0xff]
    %v52 = vld [vmem:[#allocation6 + $0x10] sm:$0xff]
    %v53 = vld [vmem:[#allocation6 + $0x18] sm:$0xff]
    %v54 = vld [vmem:[#allocation6 + $0x20] sm:$0xff]
    %v55 = vld [vmem:[#allocation6 + $0x28] sm:$0xff]
    %v56 = vld [vmem:[#allocation6 + $0x30] sm:$0xff]
    %v57 = vld [vmem:[#allocation6 + $0x38] sm:$0xff]
    %v58 = vld [vmem:[#allocation6 + $0x40] sm:$0xff]
    %v59 = vld [vmem:[#allocation6 + $0x48] sm:$0xff]
    %v60 = vld [vmem:[#allocation6 + $0x50] sm:$0xff]
    %v61 = vld [vmem:[#allocation6 + $0x58] sm:$0xff]
    %v62 = vld [vmem:[#allocation6 + $0x60] sm:$0xff]
    %v63 = vld [vmem:[#allocation6 + $0x68] sm:$0xff]
    %v64 = vld [vmem:[#allocation6 + $0x70] sm:$0xff]
    %v65 = vld [vmem:[#allocation6 + $0x78] sm:$0xff]
    %66 = vmatprep.subr.mxu0 0.0
    %67 = vmatpush1.msra.mxu0 %v50
    %68 = vmatprep.subr.mxu0 0.0
    %69 = vmatpush1.msra.mxu0 %v51
    %70 = vmatprep.subr.mxu0 0.0
    %71 = vmatpush1.msra.mxu0 %v52
    %72 = vmatprep.subr.mxu0 0.0
    %73 = vmatpush1.msra.mxu0 %v53
    %74 = vmatprep.subr.mxu0 0.0
    %75 = vmatpush1.msra.mxu0 %v54
    %76 = vmatprep.subr.mxu0 0.0
    %77 = vmatpush1.msra.mxu0 %v55
    %78 = vmatprep.subr.mxu0 0.0
    %79 = vmatpush1.msra.mxu0 %v56
    %80 = vmatprep.subr.mxu0 0.0
    %81 = vmatpush1.msra.mxu0 %v57
    %82 = vmatprep.subr.mxu0 0.0
    %83 = vmatpush1.msra.mxu0 %v58
    %84 = vmatprep.subr.mxu0 0.0
    %85 = vmatpush1.msra.mxu0 %v59
    %86 = vmatprep.subr.mxu0 0.0
    %87 = vmatpush1.msra.mxu0 %v60
    %88 = vmatprep.subr.mxu0 0.0
    %89 = vmatpush1.msra.mxu0 %v61
    %90 = vmatprep.subr.mxu0 0.0
    %91 = vmatpush1.msra.mxu0 %v62
    %92 = vmatprep.subr.mxu0 0.0
    %93 = vmatpush1.msra.mxu0 %v63
    %94 = vmatprep.subr.mxu0 0.0
    %95 = vmatpush1.msra.mxu0 %v64
    %96 = vmatprep.subr.mxu0 0.0
    %97 = vmatpush1.msra.mxu0 %v65
    %98 = vmatprep.subr.mxu0 0.0
    %99 = vmatpush1.msra.mxu0 0.0
    %100 = vmatprep.subr.mxu0 0.0
    %101 = vmatpush1.msra.mxu0 0.0
    %102 = vmatprep.subr.mxu0 0.0
    %103 = vmatpush1.msra.mxu0 0.0
    %104 = vmatprep.subr.mxu0 0.0
    %105 = vmatpush1.msra.mxu0 0.0
    %106 = vmatprep.subr.mxu0 0.0
    %107 = vmatpush1.msra.mxu0 0.0
    %108 = vmatprep.subr.mxu0 0.0
    %109 = vmatpush1.msra.mxu0 0.0
    %110 = vmatprep.subr.mxu0 0.0
    %111 = vmatpush1.msra.mxu0 0.0
    %112 = vmatprep.subr.mxu0 0.0
    %113 = vmatpush1.msra.mxu0 0.0
    %114 = vmatprep.subr.mxu0 0.0
    %115 = vmatpush1.msra.mxu0 0.0
    %116 = vmatprep.subr.mxu0 0.0
    %117 = vmatpush1.msra.mxu0 0.0
    %118 = vmatprep.subr.mxu0 0.0
    %119 = vmatpush1.msra.mxu0 0.0
    %120 = vmatprep.subr.mxu0 0.0
    %121 = vmatpush1.msra.mxu0 0.0
    %122 = vmatprep.subr.mxu0 0.0
    %123 = vmatpush1.msra.mxu0 0.0
    %124 = vmatprep.subr.mxu0 0.0
    %125 = vmatpush1.msra.mxu0 0.0
    %126 = vmatprep.subr.mxu0 0.0
    %127 = vmatpush1.msra.mxu0 0.0
    %128 = vmatprep.subr.mxu0 0.0
    %129 = vmatpush1.msra.mxu0 0.0
    %130 = vmatprep.mubr.f32.mxu0 0.0
    %131 = vmatmul.mubr.f32.gmra.mrb[0].mxu0 %v48
    %v132 = vpop.f32.mrb[0].mxu0
    %v133 = vadd.f32 0.0, %v132
    %v134 = vpop.f32.mrb[0].mxu0
    %135 = vmatprep.mubr.f32.mxu0 0.0
    %136 = vmatmul.mubr.f32.gmra.mrb[0].mxu0 %v49
    %v137 = vpop.f32.mrb[0].mxu0
    %v138 = vadd.f32 0.0, %v137
    %v139 = vpop.f32.mrb[0].mxu0
    %140 = vdwg.mxu0
    %v141 = vadd.f32 %v46, %v133
    %v142 = vadd.f32 %v47, %v138
    %143 = vst [vmem:[#allocation2] sm:$0xff] %v141
    %144 = vst [vmem:[#allocation2 + $0x8] sm:$0xff] %v142
    // Predicated region
    $region22: #{tpu_custom_call.1} parent=1 // pred_check
      %p145 = pneg %p40
    $region23: #{tpu_custom_call.1} parent=1 // pred_check_branch
      %147 = sbr.rel (%p145) target = $region25
    $region24: #{tpu_custom_call.1} parent=1 // pred_region
      %v148 = vld [vmem:[#allocation2] sm:$0xff]
      %v149 = vld [vmem:[#allocation2 + $0x8] sm:$0xff]
      %150 = vst [vmem:[#allocation8] sm:$0xff] %v148
      %151 = vst [vmem:[#allocation8 + $0x8] sm:$0xff] %v149
    $region25: #{tpu_custom_call.1} parent=1 // pred_fallthru
      _
    // Predicated region
    $region26: #{tpu_custom_call.1} parent=1 // pred_check
      _
    $region27: #{tpu_custom_call.1} parent=1 // pred_check_branch
      %153 = sbr.rel (0) target = $region29
    $region28: #{tpu_custom_call.1} parent=1 // pred_region
      %s155 = ssub.s32 256, 256
      %156 = vsyncadd [#allocation5], %s155
      %s157 = sshll.u32 [#allocation8], 4
      %s158 = int_to_ptr.vmem [resolvable:$true] %s157
      %163 = dma.vmem_to_hbm [thread:$0]  %s158, 256, %s2, [#allocation5], 128, 128, 8
    $region29: #{tpu_custom_call.1} parent=1 // pred_fallthru
      _
    // Predicated region
    $region30: #{tpu_custom_call.1} parent=1 // pred_check
      _
    $region31: #{tpu_custom_call.1} parent=1 // pred_check_branch
      %165 = sbr.rel (0) target = $region33
    $region32: #{tpu_custom_call.1} parent=1 // pred_region
      %166 = dma.done [#allocation5], 256
    $region33: #{tpu_custom_call.1} parent=1 // pred_fallthru
      _
    %167 = vsyncpa [#allocation4], 1
    %168 = vsyncpa [#allocation7], 1
    %169 = vsyncpa [#allocation5], 1

</llo_original>
